<compile_context>
chip_gen: v7x
topology: tpu7x:2x2x1
jax: 0.10.0
libtpu: 0.0.40
codegen_flags: <defaults>
</compile_context>

<pallas_src>
import functools
import math

import jax
import jax.numpy as jnp
from jax.experimental import pallas as pl
from jax.experimental.pallas import tpu as pltpu


# ---------------------------------------------------------------------------
# Pallas kernel: per-sample selected head of NetworkV3
#   out[b, s] = sum_h hs_cat[b, s, h] * w_sel[b, h] + b_sel[b]
# where hs_cat = cat(hidden[-1], hidden[-2]) and (w_sel, b_sel) is the Linear
# row picked by each sample's sentiment label (selection done in the wrapper).
# ---------------------------------------------------------------------------
def _head_kernel(hs_ref, w_ref, b_ref, out_ref):
    # Dropout(0.1) is identity in eval mode.
    # TODO(synk): training-mode dropout not implemented.
    # bf16 multiply (native VPU on v6e/v7x); upconvert to f32 only at the lane
    # reduce, so no (bb, bs, 2H) f32 temporaries are materialized.
    prod = hs_ref[...] * w_ref[...]                          # (bb, bs, 2H) bf16
    acc = jnp.sum(prod.astype(jnp.float32), axis=-1)         # (bb, bs)     f32
    out_ref[...] = acc[:, None, :] + b_ref[...]              # (bb, 1, bs)  f32


def _choose_tiles(B, S, H2, *, block_b=4, act_budget_bytes=8 << 20):
    """Pick (batch_block, seq_block) so the double-buffered bf16 activation
    tiles stay within `act_budget_bytes` (fits v5e's 16 MiB default scoped
    VMEM and v7x's 64 MiB at BERT-base shapes) while keeping lane-dense,
    128-multiple S blocks."""
    bb = max(1, min(block_b, B))
    bs = S

    def dbuf_bytes(bb_, bs_):
        return 2 * bb_ * bs_ * H2 * 2        # 2 pipeline buffers x bf16 tile

    if S % 128 == 0:
        while dbuf_bytes(bb, bs) > act_budget_bytes and bs > 128:
            bs = max(128, ((bs // 2) // 128) * 128)
    while dbuf_bytes(bb, bs) > act_budget_bytes and bb > 1:
        bb = max(1, bb // 2)
    return bb, bs


def networkv3_head(hs_cat, w_cat, bias, sentiment_labels, *,
                   block_b=4, act_budget_bytes=8 << 20):
    """hs_cat: (B, S, 2H) = cat(hidden[-1], hidden[-2]); w_cat: (3, 2H) packed
    torch nn.Linear(2H, 1) rows; bias: (3,); sentiment_labels: (B,) in {0,1,2}."""
    B, S, H2 = hs_cat.shape

    # torch: logits_k = hs_cat @ W_k^T + b_k ; out[i] = logits_{label[i]}.
    # Select each sample's weight row / bias up front: no dead padded lanes and
    # no in-kernel label select.  (jnp gather clamps out-of-range labels where
    # torch indexing would raise.)
    labels = sentiment_labels.astype(jnp.int32)
    w_sel = w_cat[labels].astype(jnp.bfloat16)[:, None, :]        # (B, 1, 2H) bf16
    b_sel = bias[labels].astype(jnp.float32)[:, None, None]       # (B, 1, 1)  f32

    # The backbone already emits bf16, so this cast is a no-op on that path.
    # A real f32 backbone should cast inside its own epilogue instead.
    hs = hs_cat if hs_cat.dtype == jnp.bfloat16 else hs_cat.astype(jnp.bfloat16)

    bb, bs = _choose_tiles(B, S, H2, block_b=block_b,
                           act_budget_bytes=act_budget_bytes)
    nb, ns = pl.cdiv(B, bb), pl.cdiv(S, bs)

    # Never pad the big activation tensor: Pallas clips the ragged last block
    # and masks its stores.  Only the tiny per-sample operands get padded so
    # their batch-block DMAs are fully in-bounds.
    Bp = nb * bb
    if Bp != B:
        w_sel = jnp.pad(w_sel, ((0, Bp - B), (0, 0), (0, 0)))
        b_sel = jnp.pad(b_sel, ((0, Bp - B), (0, 0), (0, 0)))

    act_tile = bb * bs * H2 * 2                    # bf16 activation tile
    per_step = act_tile + bb * H2 * 2 + bb * 4 + bb * bs * 4
    vmem_limit = int(min(64 << 20, max(8 << 20, 4 * per_step)))

    out = pl.pallas_call(
        _head_kernel,
        out_shape=jax.ShapeDtypeStruct((B, 1, S), jnp.float32),
        grid_spec=pl.GridSpec(
            grid=(nb, ns),
            in_specs=[
                pl.BlockSpec((bb, bs, H2), lambda i, j: (i, j, 0)),  # activations
                pl.BlockSpec((bb, 1, H2), lambda i, j: (i, 0, 0)),   # selected W rows
                pl.BlockSpec((bb, 1, 1), lambda i, j: (i, 0, 0)),    # selected bias
            ],
            out_specs=pl.BlockSpec((bb, 1, bs), lambda i, j: (i, 0, j)),
        ),
        # Independent (batch, seq) blocks -> megacore-shardable on v7x.
        compiler_params=pltpu.CompilerParams(
            dimension_semantics=("parallel", "parallel"),
            vmem_limit_bytes=vmem_limit,
        ),
    )(hs, w_sel, b_sel)
    return out[:, 0, :]                                            # (B, S)


# ---------------------------------------------------------------------------
# Deterministic toy "BERT" backbone (plain JAX glue): embedding + 2 encoder
# layers.  Returns (last_hidden_state_f32, cat(hidden[-1], hidden[-2]) bf16);
# the concat + bf16 downcast live in the backbone epilogue so the head reads a
# single bf16 HBM stream with no standalone convert pass.
# ---------------------------------------------------------------------------
def _layer_norm(x, eps=1e-12):
    mu = jnp.mean(x, axis=-1, keepdims=True)
    var = jnp.var(x, axis=-1, keepdims=True)
    return (x - mu) * jax.lax.rsqrt(var + eps)


def init_toy_bert(key, vocab, hidden, n_layers=2):
    keys = jax.random.split(key, 1 + n_layers)
    params = {
        "emb": 0.02 * jax.random.normal(keys[0], (vocab, hidden), jnp.float32),
        "layers": [],
    }
    for li in range(n_layers):
        ks = jax.random.split(keys[1 + li], 6)
        s = 1.0 / math.sqrt(hidden)
        params["layers"].append({
            "wq": s * jax.random.normal(ks[0], (hidden, hidden), jnp.float32),
            "wk": s * jax.random.normal(ks[1], (hidden, hidden), jnp.float32),
            "wv": s * jax.random.normal(ks[2], (hidden, hidden), jnp.float32),
            "wo": s * jax.random.normal(ks[3], (hidden, hidden), jnp.float32),
            "w1": s * jax.random.normal(ks[4], (hidden, 4 * hidden), jnp.float32),
            "w2": (1.0 / math.sqrt(4 * hidden))
                  * jax.random.normal(ks[5], (4 * hidden, hidden), jnp.float32),
        })
    return params


def toy_bert_forward(params, input_ids, masks):
    H = params["emb"].shape[1]
    x = params["emb"][input_ids]                                   # (B, S, H) f32
    hidden_states = [x]
    attn_bias = (1.0 - masks.astype(jnp.float32))[:, None, :] * -1e9   # (B,1,S)
    for lyr in params["layers"]:
        q = x @ lyr["wq"]
        k = x @ lyr["wk"]
        v = x @ lyr["wv"]
        scores = jnp.einsum("bqd,bkd->bqk", q, k) / math.sqrt(H) + attn_bias
        attn = jax.nn.softmax(scores, axis=-1)
        ctx = jnp.einsum("bqk,bkd->bqd", attn, v) @ lyr["wo"]
        x = _layer_norm(x + ctx)
        ff = jax.nn.gelu(x @ lyr["w1"]) @ lyr["w2"]
        x = _layer_norm(x + ff)
        hidden_states.append(x)
    hs_cat = jnp.concatenate([hidden_states[-1], hidden_states[-2]],
                             axis=-1).astype(jnp.bfloat16)          # (B, S, 2H)
    return x, hs_cat


# ---------------------------------------------------------------------------
# Full NetworkV3 forward (backbone in JAX, head in Pallas).
# ---------------------------------------------------------------------------
def networkv3_forward(bert_params, head_w, head_b, input_ids, masks,
                      sentiment_labels, return_hidden=False):
    _, hs_cat = toy_bert_forward(bert_params, input_ids, masks)
    out = networkv3_head(hs_cat, head_w, head_b, sentiment_labels)
    if return_hidden:
        return out, hs_cat
    return out


if __name__ == "__main__":
    B, S, H, VOCAB = 16, 128, 128, 64

    key = jax.random.PRNGKey(0)
    k_bert, k_ids, k_w, k_b, k_lbl = jax.random.split(key, 5)

    bert_params = init_toy_bert(k_bert, VOCAB, H, n_layers=2)

    input_ids = jax.random.randint(k_ids, (B, S), 0, VOCAB, dtype=jnp.int32)
    masks = jnp.ones((B, S), jnp.int32).at[:, S - 16:].set(0)
    sentiment_labels = jax.random.randint(k_lbl, (B,), 0, 3, dtype=jnp.int32)

    # 3 x nn.Linear(2H, 1), packed as (3, 2H) weight + (3,) bias.
    bound = 1.0 / math.sqrt(2 * H)
    head_w = jax.random.uniform(k_w, (3, 2 * H), jnp.float32, -bound, bound)
    head_b = jax.random.uniform(k_b, (3,), jnp.float32, -bound, bound)

    fwd = jax.jit(functools.partial(networkv3_forward, return_hidden=True))
    out, hs_cat_bf16 = fwd(bert_params, head_w, head_b,
                           input_ids, masks, sentiment_labels)
    out = jax.block_until_ready(out)

    # Sanity check against a plain-JAX head on the same bf16 hidden states and
    # bf16-cast weights the kernel consumes; the remaining deltas are the
    # in-kernel bf16 product rounding and reduction order.
    hs_f = hs_cat_bf16.astype(jnp.float32)                              # (B, S, 2H)
    w_sel = head_w[sentiment_labels].astype(jnp.bfloat16).astype(jnp.float32)
    b_sel = head_b[sentiment_labels]
    ref = jnp.einsum("bsh,bh->bs", hs_f, w_sel) + b_sel[:, None]        # (B, S)

    assert out.shape == (B, S)
    err = float(jnp.max(jnp.abs(out - ref)))
    assert jnp.allclose(out, ref, atol=2e-2, rtol=2e-2), err

    print("KERNEL_OK")
</pallas_src>

<mosaic_0001>
module attributes {stable_mosaic.version = 11 : i64} {
  func.func @_head_kernel(%arg0: i32, %arg1: i32, %arg2: memref<4x128x256xbf16, #tpu.memory_space<vmem>>, %arg3: memref<4x1x256xbf16, #tpu.memory_space<vmem>>, %arg4: memref<4x1x1xf32, #tpu.memory_space<vmem>>, %arg5: memref<4x1x128xf32, #tpu.memory_space<vmem>>) attributes {dimension_semantics = [#tpu.dimension_semantics<parallel>, #tpu.dimension_semantics<parallel>], iteration_bounds = array<i64: 4, 1>, scalar_prefetch = 0 : i64, scratch_operands = 0 : i64, tpu.core_type = #tpu.core_type<tc>, window_params = [{transform_indices = @transform_0, window_bounds = array<i64: 4, 128, 256>}, {transform_indices = @transform_1, window_bounds = array<i64: 4, 1, 256>}, {transform_indices = @transform_2, window_bounds = array<i64: 4, 1, 1>}, {transform_indices = @transform_3, window_bounds = array<i64: 4, 1, 128>}]} {
    %c0 = arith.constant 0 : index
    %c0_0 = arith.constant 0 : index
    %c0_1 = arith.constant 0 : index
    %0 = vector.load %arg2[%c0, %c0_0, %c0_1] : memref<4x128x256xbf16, #tpu.memory_space<vmem>>, vector<4x128x256xbf16>
    %c0_2 = arith.constant 0 : index
    %c0_3 = arith.constant 0 : index
    %c0_4 = arith.constant 0 : index
    %1 = vector.load %arg3[%c0_2, %c0_3, %c0_4] : memref<4x1x256xbf16, #tpu.memory_space<vmem>>, vector<4x1x256xbf16>
    %2 = vector.broadcast %1 : vector<4x1x256xbf16> to vector<4x128x256xbf16>
    %3 = arith.mulf %0, %2 : vector<4x128x256xbf16>
    %4 = arith.extf %3 : vector<4x128x256xbf16> to vector<4x128x256xf32>
    %cst = arith.constant dense<0.000000e+00> : vector<4x128xf32>
    %5 = vector.multi_reduction <add>, %4, %cst [2] : vector<4x128x256xf32> to vector<4x128xf32>
    %6 = vector.shape_cast %5 : vector<4x128xf32> to vector<4x1x128xf32>
    %c0_5 = arith.constant 0 : index
    %c0_6 = arith.constant 0 : index
    %c0_7 = arith.constant 0 : index
    %7 = vector.load %arg4[%c0_5, %c0_6, %c0_7] : memref<4x1x1xf32, #tpu.memory_space<vmem>>, vector<4x1x1xf32>
    %8 = vector.broadcast %7 : vector<4x1x1xf32> to vector<4x1x128xf32>
    %9 = arith.addf %6, %8 : vector<4x1x128xf32>
    %c0_8 = arith.constant 0 : index
    %c0_9 = arith.constant 0 : index
    %c0_10 = arith.constant 0 : index
    %10 = vector.load %arg5[%c0_8, %c0_9, %c0_10] : memref<4x1x128xf32, #tpu.memory_space<vmem>>, vector<4x1x128xf32>
    tpu.vector_store %arg5[%c0_8, %c0_9, %c0_10], %9 {strides = array<i32>} : memref<4x1x128xf32, #tpu.memory_space<vmem>>, vector<4x1x128xf32>,
    return
  }
  func.func @transform_0(%arg0: i32, %arg1: i32) -> (i32, i32, i32) {
    %c0_i32 = arith.constant 0 : i32
    %c0_i32_0 = arith.constant 0 : i32
    return %arg0, %arg1, %c0_i32 : i32, i32, i32
  }
  func.func @transform_1(%arg0: i32, %arg1: i32) -> (i32, i32, i32) {
    %c0_i32 = arith.constant 0 : i32
    %c0_i32_0 = arith.constant 0 : i32
    %c0_i32_1 = arith.constant 0 : i32
    return %arg0, %c0_i32, %c0_i32_0 : i32, i32, i32
  }
  func.func @transform_2(%arg0: i32, %arg1: i32) -> (i32, i32, i32) {
    %c0_i32 = arith.constant 0 : i32
    %c0_i32_0 = arith.constant 0 : i32
    %c0_i32_1 = arith.constant 0 : i32
    return %arg0, %c0_i32, %c0_i32_0 : i32, i32, i32
  }
  func.func @transform_3(%arg0: i32, %arg1: i32) -> (i32, i32, i32) {
    %c0_i32 = arith.constant 0 : i32
    %c0_i32_0 = arith.constant 0 : i32
    return %arg0, %c0_i32, %arg1 : i32, i32, i32
  }
}

</mosaic_0001>

<llo_original>
// kernel: networkv3_forward.1
$region0: #{networkv3_forward.1}
  #allocation0 [shape = 'u32[]', space=smem, size = 0x4, offset = 0x4, fixed_abs, tag = 'smem constant byte address 0x4 - core index']
  #allocation1 [shape = 'u32[144,128]{1,0:T(1,128)}', space=vmem, size = 0x12000, scoped, tag = 'internal scratch']
  %s0 = inlined_call_operand.vmem [shape: bf16[16,128,256], index: 0, kind: input, shape index: {}]
  %s1 = inlined_call_operand.vmem [shape: bf16[16,1,256], index: 1, kind: input, shape index: {}]
  %s2 = inlined_call_operand.vmem [shape: f32[16,1,1], index: 2, kind: input, shape index: {}]
  %s3 = inlined_call_operand.hbm [shape: f32[16,1,128], index: 3, kind: output, shape index: {}]
  %s4 = sld [smem:[#allocation0]]
  $region45: #{networkv3_forward.1} parent=0
    _
  %s6 = ssub.s32 1, %s4
  %s7 = scalar_select 0, %s6, %s4
  $region1: #{networkv3_forward.1} parent=0
    #allocation2 [shape = 'u8[4096]{0}', space=vmem, size = 0x1000, scoped, tag = 'output window, operand 0']
    #allocation3 [shape = 's32[2]{0}', space=sflag, size = 0x8, scoped, tag = 'scoped memory for networkv3_forward.1']
    %8 = vsyncpa [#allocation3], 0
    %s9 = scalar_lea.sflag [#allocation3], 1
    %10 = vsyncpa %s9, 0
    loop: start=0, step=1, limit=6
    $region2: #{networkv3_forward.1} parent=1 // loop_pre_header
      _
    $region3: #{networkv3_forward.1} parent=1 // loop_header
      %s12 = sphi 0, %s16
      %p13 = scmp.ge.s32.totalorder %s12, 6
      %s19 = sphi 0, %s31
      %s20 = sphi 0, %s27
      %s21 = sphi 0, %s19
      %s22 = sphi 0, %s20
      %s23 = sphi 0, %s21
      %s24 = sphi 0, %s22
      %s36 = sphi 0, %s38
      %s39 = sphi 0, %s36
      %s40 = sphi 0, %s39
      %s56 = sphi 0, %s40
      %s62 = sphi 0, %s64
      %s65 = sphi 0, %s62
      %s66 = sphi 0, %s65
      %s82 = sphi 0, %s66
      %s88 = sphi 0, %s90
      %s91 = sphi 0, %s88
      %s92 = sphi 0, %s91
      %s108 = sphi 0, %s92
      %s116 = sphi 0, %s118
      %s119 = sphi 0, %s116
      %s120 = sphi 0, %s119
      %s136 = sphi 0, %s120
    $region4: #{networkv3_forward.1} parent=1 // loop_header_branch
      %15 = sbr.rel (%p13) target = $region8
    $region5: #{networkv3_forward.1} parent=1 // loop_body
      %s17 = ssub.s32 %s12, 1
      %s18 = ssub.s32 %s12, 2
      %s25 = sadd.s32 1, %s20
      %p26 = scmp.ge.s32.totalorder %s25, 1
      %s27 = scalar_select %p26, 0, %s25
      %s28 = sadd.s32 1, %s19
      %s29 = scalar_select %p26, %s28, %s19
      %p30 = scmp.ge.s32.totalorder %s29, 4
      %s31 = scalar_select %p30, 0, %s29
      %s32 = ssub.s32 %s19, %s31
      %s33 = ssub.s32 %s20, %s27
      %s34 = sor.u32 %s32, %s33
      %p35 = scmp.eq.s32.totalorder %s34, 0
      %s37 = sadd.s32 %s36, 1
      %s38 = scalar_select %p35, %s36, %s37
      %p41 = pneg %p35
      %p42 = scmp.eq.s32.totalorder %s12, 3
      %p43 = por %p41, %p42
      %p44 = scmp.ne.s32.totalorder %s36, %s39
      %p45 = scmp.eq.s32.totalorder %s12, 0
      %p46 = por %p44, %p45
      %p47 = scmp.ne.s32.totalorder %s36, %s39
      %p48 = scmp.eq.s32.totalorder %s17, 3
      %p49 = por %p47, %p48
      %p50 = scmp.ne.s32.totalorder %s39, %s40
      %p51 = scmp.eq.s32.totalorder %s17, 0
      %p52 = por %p50, %p51
      %p53 = scmp.ne.s32.totalorder %s39, %s40
      %p54 = scmp.eq.s32.totalorder %s18, 3
      %p55 = por %p53, %p54
      %p57 = scmp.ne.s32.totalorder %s40, %s56
      %p58 = scmp.eq.s32.totalorder %s18, 0
      %p59 = por %p57, %p58
      %s60 = ssub.s32 %s19, %s31
      %p61 = scmp.eq.s32.totalorder %s60, 0
      %s63 = sadd.s32 %s62, 1
      %s64 = scalar_select %p61, %s62, %s63
      %p67 = pneg %p61
      %p68 = scmp.eq.s32.totalorder %s12, 3
      %p69 = por %p67, %p68
      %p70 = scmp.ne.s32.totalorder %s62, %s65
      %p71 = scmp.eq.s32.totalorder %s12, 0
      %p72 = por %p70, %p71
      %p73 = scmp.ne.s32.totalorder %s62, %s65
      %p74 = scmp.eq.s32.totalorder %s17, 3
      %p75 = por %p73, %p74
      %p76 = scmp.ne.s32.totalorder %s65, %s66
      %p77 = scmp.eq.s32.totalorder %s17, 0
      %p78 = por %p76, %p77
      %p79 = scmp.ne.s32.totalorder %s65, %s66
      %p80 = scmp.eq.s32.totalorder %s18, 3
      %p81 = por %p79, %p80
      %p83 = scmp.ne.s32.totalorder %s66, %s82
      %p84 = scmp.eq.s32.totalorder %s18, 0
      %p85 = por %p83, %p84
      %s86 = ssub.s32 %s19, %s31
      %p87 = scmp.eq.s32.totalorder %s86, 0
      %s89 = sadd.s32 %s88, 1
      %s90 = scalar_select %p87, %s88, %s89
      %p93 = pneg %p87
      %p94 = scmp.eq.s32.totalorder %s12, 3
      %p95 = por %p93, %p94
      %p96 = scmp.ne.s32.totalorder %s88, %s91
      %p97 = scmp.eq.s32.totalorder %s12, 0
      %p98 = por %p96, %p97
      %p99 = scmp.ne.s32.totalorder %s88, %s91
      %p100 = scmp.eq.s32.totalorder %s17, 3
      %p101 = por %p99, %p100
      %p102 = scmp.ne.s32.totalorder %s91, %s92
      %p103 = scmp.eq.s32.totalorder %s17, 0
      %p104 = por %p102, %p103
      %p105 = scmp.ne.s32.totalorder %s91, %s92
      %p106 = scmp.eq.s32.totalorder %s18, 3
      %p107 = por %p105, %p106
      %p109 = scmp.ne.s32.totalorder %s92, %s108
      %p110 = scmp.eq.s32.totalorder %s18, 0
      %p111 = por %p109, %p110
      %s112 = ssub.s32 %s19, %s31
      %s113 = ssub.s32 %s20, %s27
      %s114 = sor.u32 %s112, %s113
      %p115 = scmp.eq.s32.totalorder %s114, 0
      %s117 = sadd.s32 %s116, 1
      %s118 = scalar_select %p115, %s116, %s117
      %p121 = pneg %p115
      %p122 = scmp.eq.s32.totalorder %s12, 3
      %p123 = por %p121, %p122
      %p124 = scmp.ne.s32.totalorder %s116, %s119
      %p125 = scmp.eq.s32.totalorder %s12, 0
      %p126 = por %p124, %p125
      %p127 = scmp.ne.s32.totalorder %s116, %s119
      %p128 = scmp.eq.s32.totalorder %s17, 3
      %p129 = por %p127, %p128
      %p130 = scmp.ne.s32.totalorder %s119, %s120
      %p131 = scmp.eq.s32.totalorder %s17, 0
      %p132 = por %p130, %p131
      %p133 = scmp.ne.s32.totalorder %s119, %s120
      %p134 = scmp.eq.s32.totalorder %s18, 3
      %p135 = por %p133, %p134
      %p137 = scmp.ne.s32.totalorder %s120, %s136
      %p138 = scmp.eq.s32.totalorder %s18, 0
      %p139 = por %p137, %p138
      %p140 = scmp.le.s32.totalorder 1, %s12
      %p141 = scmp.lt.s32.totalorder %s12, 5
      %p142 = pnand %p140, %p141
      %p143 = pneg %p142
      // Predicated region
      $region9: #{networkv3_forward.1} parent=5 // pred_check
        _
      $region10: #{networkv3_forward.1} parent=5 // pred_check_branch
        %145 = sbr.rel (%p142) target = $region12
      $region11: #{networkv3_forward.1} parent=5 // pred_region
        %s146 = ssub.s32 %s12, 1
      $region12: #{networkv3_forward.1} parent=5 // pred_fallthru
        _
      %p147 = scmp.lt.s32.totalorder %s12, 4
      // Predicated region
      $region13: #{networkv3_forward.1} parent=5 // pred_check
        %p148 = pneg %p147
      $region14: #{networkv3_forward.1} parent=5 // pred_check_branch
        %150 = sbr.rel (%p148) target = $region16
      $region15: #{networkv3_forward.1} parent=5 // pred_region
        // Predicated region
        $region17: #{networkv3_forward.1} parent=15 // pred_check
          %p151 = pneg %p46
        $region18: #{networkv3_forward.1} parent=15 // pred_check_branch
          %153 = sbr.rel (%p151) target = $region20
        $region19: #{networkv3_forward.1} parent=15 // pred_region
          %s154 = smul.u32 4, %s19
          %s155 = smul.u32 16, %s20
          %p156 = scmp.lt.s32.totalorder %s154, 15
          %s157 = scalar_select %p156, %s154, 15
          %p158 = scmp.lt.s32.totalorder %s155, 15
          %s159 = scalar_select %p158, %s155, 15
          %s160 = smul.addr %s159, 2
          %s161 = smul.addr %s157, 32
          %s162 = sadd.s32 %s160, %s161
          %s163 = smul.addr %s162, 4
          %s164 = scalar_lea.vmem %s0, %s163
          %s165 = smul.u32 4, %s19
          %s166 = smul.u32 16, %s20
        $region20: #{networkv3_forward.1} parent=15 // pred_fallthru
          _
        // Predicated region
        $region21: #{networkv3_forward.1} parent=15 // pred_check
          %p167 = pneg %p72
        $region22: #{networkv3_forward.1} parent=15 // pred_check_branch
          %169 = sbr.rel (%p167) target = $region24
        $region23: #{networkv3_forward.1} parent=15 // pred_region
          %s170 = smul.u32 4, %s19
          %p171 = scmp.lt.s32.totalorder %s170, 15
          %s172 = scalar_select %p171, %s170, 15
          %s173 = smul.addr %s172, 2
          %s174 = scalar_lea.vmem %s1, %s173
          %s175 = smul.u32 4, %s19
        $region24: #{networkv3_forward.1} parent=15 // pred_fallthru
          _
        // Predicated region
        $region25: #{networkv3_forward.1} parent=15 // pred_check
          %p176 = pneg %p98
        $region26: #{networkv3_forward.1} parent=15 // pred_check_branch
          %178 = sbr.rel (%p176) target = $region28
        $region27: #{networkv3_forward.1} parent=15 // pred_region
          %s179 = smul.u32 4, %s19
          %p180 = scmp.lt.s32.totalorder %s179, 15
          %s181 = scalar_select %p180, %s179, 15
          %s182 = scalar_lea.vmem %s2, %s181
          %s183 = smul.u32 4, %s19
        $region28: #{networkv3_forward.1} parent=15 // pred_fallthru
          _
      $region16: #{networkv3_forward.1} parent=5 // pred_fallthru
        _
      %p184 = scmp.le.s32.totalorder 1, %s12
      %p185 = scmp.lt.s32.totalorder %s12, 5
      %p186 = pnand %p184, %p185
      %p187 = pneg %p186
      // Predicated region
      $region29: #{networkv3_forward.1} parent=5 // pred_check
        _
      $region30: #{networkv3_forward.1} parent=5 // pred_check_branch
        %189 = sbr.rel (%p186) target = $region32
      $region31: #{networkv3_forward.1} parent=5 // pred_region
        %s190 = ssub.s32 %s12, 1
        %s191 = smul.u32 4, %s21
        %s192 = smul.u32 16, %s22
        %p193 = scmp.lt.s32.totalorder %s191, 15
        %s194 = scalar_select %p193, %s191, 15
        %p195 = scmp.lt.s32.totalorder %s192, 15
        %s196 = scalar_select %p195, %s192, 15
        %s197 = smul.addr %s196, 2
        %s198 = smul.addr %s194, 32
        %s199 = sadd.s32 %s197, %s198
        %s200 = smul.addr %s199, 4
        %s201 = scalar_lea.vmem %s0, %s200
        %p202 = pneg %p52
        %p203 = pneg %p49
        %s204 = smul.u32 4, %s21
        %p205 = scmp.lt.s32.totalorder %s204, 15
        %s206 = scalar_select %p205, %s204, 15
        %s207 = smul.addr %s206, 2
        %s208 = scalar_lea.vmem %s1, %s207
        %p209 = pneg %p78
        %p210 = pneg %p75
        %s211 = smul.u32 4, %s21
        %p212 = scmp.lt.s32.totalorder %s211, 15
        %s213 = scalar_select %p212, %s211, 15
        %s214 = scalar_lea.vmem %s2, %s213
        %p215 = pneg %p104
        %p216 = pneg %p101
        %p217 = pneg %p132
        %p218 = pneg %p129
        %s219 = sand.u32 %s119, 1
        %s220 = scalar_lea.sflag [#allocation3], %s219
        %s221 = sand.u32 %s119, 1
        %s222 = smul.addr %s221, 4
        %s223 = scalar_lea.vmem [#allocation2], %s222
        %s224 = smul.u32 4, %s21
        %s225 = smul.u32 16, %s22
        %p226 = scmp.lt.s32.totalorder %s224, 15
        %s227 = scalar_select %p226, %s224, 15
        %p228 = scmp.lt.s32.totalorder %s225, 15
        %s229 = scalar_select %p228, %s225, 15
        %s230 = smul.addr %s229, 2
        %s231 = smul.addr %s227, 32
        %s232 = sadd.s32 %s230, %s231
        %s233 = smul.addr %s232, 4
        %s234 = scalar_lea.vmem %s0, %s233
        %s235 = smul.u32 4, %s21
        %s236 = smul.u32 16, %s22
        %s237 = smul.u32 4, %s21
        %p238 = scmp.lt.s32.totalorder %s237, 15
        %s239 = scalar_select %p238, %s237, 15
        %s240 = smul.addr %s239, 2
        %s241 = scalar_lea.vmem %s1, %s240
        %s242 = smul.u32 4, %s21
        %s243 = smul.u32 4, %s21
        %p244 = scmp.lt.s32.totalorder %s243, 15
        %s245 = scalar_select %p244, %s243, 15
        %s246 = scalar_lea.vmem %s2, %s245
        %s247 = smul.u32 4, %s21
        %s248 = smul.u32 4, %s21
        %v249 = vld [vmem:[%s234] sm:$0xff]
        %v250 = vld [vmem:[%s234 + $0x8] sm:$0xff]
        %v251 = vld [vmem:[%s234 + $0x10] sm:$0xff]
        %v252 = vld [vmem:[%s234 + $0x18] sm:$0xff]
        %v253 = vld [vmem:[%s234 + $0x20] sm:$0xff]
        %v254 = vld [vmem:[%s234 + $0x28] sm:$0xff]
        %v255 = vld [vmem:[%s234 + $0x30] sm:$0xff]
        %v256 = vld [vmem:[%s234 + $0x38] sm:$0xff]
        %v257 = vld [vmem:[%s234 + $0x40] sm:$0xff]
        %v258 = vld [vmem:[%s234 + $0x48] sm:$0xff]
        %v259 = vld [vmem:[%s234 + $0x50] sm:$0xff]
        %v260 = vld [vmem:[%s234 + $0x58] sm:$0xff]
        %v261 = vld [vmem:[%s234 + $0x60] sm:$0xff]
        %v262 = vld [vmem:[%s234 + $0x68] sm:$0xff]
        %v263 = vld [vmem:[%s234 + $0x70] sm:$0xff]
        %v264 = vld [vmem:[%s234 + $0x78] sm:$0xff]
        %v265 = vld [vmem:[%s234 + $0x80] sm:$0xff]
        %v266 = vld [vmem:[%s234 + $0x88] sm:$0xff]
        %v267 = vld [vmem:[%s234 + $0x90] sm:$0xff]
        %v268 = vld [vmem:[%s234 + $0x98] sm:$0xff]
        %v269 = vld [vmem:[%s234 + $0xa0] sm:$0xff]
        %v270 = vld [vmem:[%s234 + $0xa8] sm:$0xff]
        %v271 = vld [vmem:[%s234 + $0xb0] sm:$0xff]
        %v272 = vld [vmem:[%s234 + $0xb8] sm:$0xff]
        %v273 = vld [vmem:[%s234 + $0xc0] sm:$0xff]
        %v274 = vld [vmem:[%s234 + $0xc8] sm:$0xff]
        %v275 = vld [vmem:[%s234 + $0xd0] sm:$0xff]
        %v276 = vld [vmem:[%s234 + $0xd8] sm:$0xff]
        %v277 = vld [vmem:[%s234 + $0xe0] sm:$0xff]
        %v278 = vld [vmem:[%s234 + $0xe8] sm:$0xff]
        %v279 = vld [vmem:[%s234 + $0xf0] sm:$0xff]
        %v280 = vld [vmem:[%s234 + $0xf8] sm:$0xff]
        %v281 = vld [vmem:[%s234 + $0x100] sm:$0xff]
        %v282 = vld [vmem:[%s234 + $0x108] sm:$0xff]
        %v283 = vld [vmem:[%s234 + $0x110] sm:$0xff]
        %v284 = vld [vmem:[%s234 + $0x118] sm:$0xff]
        %v285 = vld [vmem:[%s234 + $0x120] sm:$0xff]
        %v286 = vld [vmem:[%s234 + $0x128] sm:$0xff]
        %v287 = vld [vmem:[%s234 + $0x130] sm:$0xff]
        %v288 = vld [vmem:[%s234 + $0x138] sm:$0xff]
        %v289 = vld [vmem:[%s234 + $0x140] sm:$0xff]
        %v290 = vld [vmem:[%s234 + $0x148] sm:$0xff]
        %v291 = vld [vmem:[%s234 + $0x150] sm:$0xff]
        %v292 = vld [vmem:[%s234 + $0x158] sm:$0xff]
        %v293 = vld [vmem:[%s234 + $0x160] sm:$0xff]
        %v294 = vld [vmem:[%s234 + $0x168] sm:$0xff]
        %v295 = vld [vmem:[%s234 + $0x170] sm:$0xff]
        %v296 = vld [vmem:[%s234 + $0x178] sm:$0xff]
        %v297 = vld [vmem:[%s234 + $0x180] sm:$0xff]
        %v298 = vld [vmem:[%s234 + $0x188] sm:$0xff]
        %v299 = vld [vmem:[%s234 + $0x190] sm:$0xff]
        %v300 = vld [vmem:[%s234 + $0x198] sm:$0xff]
        %v301 = vld [vmem:[%s234 + $0x1a0] sm:$0xff]
        %v302 = vld [vmem:[%s234 + $0x1a8] sm:$0xff]
        %v303 = vld [vmem:[%s234 + $0x1b0] sm:$0xff]
        %v304 = vld [vmem:[%s234 + $0x1b8] sm:$0xff]
        %v305 = vld [vmem:[%s234 + $0x1c0] sm:$0xff]
        %v306 = vld [vmem:[%s234 + $0x1c8] sm:$0xff]
        %v307 = vld [vmem:[%s234 + $0x1d0] sm:$0xff]
        %v308 = vld [vmem:[%s234 + $0x1d8] sm:$0xff]
        %v309 = vld [vmem:[%s234 + $0x1e0] sm:$0xff]
        %v310 = vld [vmem:[%s234 + $0x1e8] sm:$0xff]
        %v311 = vld [vmem:[%s234 + $0x1f0] sm:$0xff]
        %v312 = vld [vmem:[%s234 + $0x1f8] sm:$0xff]
        %v313 = vld [vmem:[%s241] sm:$0x3]
        %v314 = vld [vmem:[%s241 + $0x2] sm:$0x3]
        %v315 = vld [vmem:[%s241 + $0x4] sm:$0x3]
        %v316 = vld [vmem:[%s241 + $0x6] sm:$0x3]
        %v322 = vunpack.c.l.s4 1966171168
        %v323 = vunpack.c.0.s8 %v322
        %v324 = vlaneseq
        %v325 = vshrl.u32 %v324, 7
        %v326 = vsub.s32 %v323, %v325
        %v327 = vrot.slane %v313, %v326
        %v328 = vcombine.high %v327, %v327
        %v330 = vunpack.c.l.s4 1966171168
        %v331 = vunpack.c.0.s8 %v330
        %v332 = vlaneseq
        %v333 = vshrl.u32 %v332, 7
        %v334 = vsub.s32 %v331, %v333
        %v335 = vrot.slane %v327, %v334
        %v337 = vunpack.c.l.s4 1966171168
        %v338 = vunpack.c.0.s8 %v337
        %v339 = vlaneseq
        %v340 = vshrl.u32 %v339, 7
        %v341 = vsub.s32 %v338, %v340
        %v342 = vrot.slane %v328, %v341
        %v344 = vunpack.c.l.s4 1966171168
        %v345 = vunpack.c.0.s8 %v344
        %v346 = vlaneseq
        %v347 = vshrl.u32 %v346, 7
        %v348 = vsub.s32 %v345, %v347
        %v349 = vrot.slane %v314, %v348
        %v350 = vcombine.high %v349, %v349
        %v352 = vunpack.c.l.s4 1966171168
        %v353 = vunpack.c.0.s8 %v352
        %v354 = vlaneseq
        %v355 = vshrl.u32 %v354, 7
        %v356 = vsub.s32 %v353, %v355
        %v357 = vrot.slane %v349, %v356
        %v359 = vunpack.c.l.s4 1966171168
        %v360 = vunpack.c.0.s8 %v359
        %v361 = vlaneseq
        %v362 = vshrl.u32 %v361, 7
        %v363 = vsub.s32 %v360, %v362
        %v364 = vrot.slane %v350, %v363
        %v366 = vunpack.c.l.s4 1966171168
        %v367 = vunpack.c.0.s8 %v366
        %v368 = vlaneseq
        %v369 = vshrl.u32 %v368, 7
        %v370 = vsub.s32 %v367, %v369
        %v371 = vrot.slane %v315, %v370
        %v372 = vcombine.high %v371, %v371
        %v374 = vunpack.c.l.s4 1966171168
        %v375 = vunpack.c.0.s8 %v374
        %v376 = vlaneseq
        %v377 = vshrl.u32 %v376, 7
        %v378 = vsub.s32 %v375, %v377
        %v379 = vrot.slane %v371, %v378
        %v381 = vunpack.c.l.s4 1966171168
        %v382 = vunpack.c.0.s8 %v381
        %v383 = vlaneseq
        %v384 = vshrl.u32 %v383, 7
        %v385 = vsub.s32 %v382, %v384
        %v386 = vrot.slane %v372, %v385
        %v388 = vunpack.c.l.s4 1966171168
        %v389 = vunpack.c.0.s8 %v388
        %v390 = vlaneseq
        %v391 = vshrl.u32 %v390, 7
        %v392 = vsub.s32 %v389, %v391
        %v393 = vrot.slane %v316, %v392
        %v394 = vcombine.high %v393, %v393
        %v396 = vunpack.c.l.s4 1966171168
        %v397 = vunpack.c.0.s8 %v396
        %v398 = vlaneseq
        %v399 = vshrl.u32 %v398, 7
        %v400 = vsub.s32 %v397, %v399
        %v401 = vrot.slane %v393, %v400
        %v403 = vunpack.c.l.s4 1966171168
        %v404 = vunpack.c.0.s8 %v403
        %v405 = vlaneseq
        %v406 = vshrl.u32 %v405, 7
        %v407 = vsub.s32 %v404, %v406
        %v408 = vrot.slane %v394, %v407
        %v410 = vpack.i.b16 %v335, %v335
        %v412 = vlaneseq
        %v413 = vshrl.u32 %v412, 7
        %v414 = vsub.s32 0, %v413
        %v415 = vrot.slane %v410, %v414
        %v417 = vpack.i.b16 %v342, %v342
        %v419 = vlaneseq
        %v420 = vshrl.u32 %v419, 7
        %v421 = vsub.s32 0, %v420
        %v422 = vrot.slane %v417, %v421
        %v424 = vpack.i.b16 %v357, %v357
        %v426 = vlaneseq
        %v427 = vshrl.u32 %v426, 7
        %v428 = vsub.s32 0, %v427
        %v429 = vrot.slane %v424, %v428
        %v431 = vpack.i.b16 %v364, %v364
        %v433 = vlaneseq
        %v434 = vshrl.u32 %v433, 7
        %v435 = vsub.s32 0, %v434
        %v436 = vrot.slane %v431, %v435
        %v438 = vpack.i.b16 %v379, %v379
        %v440 = vlaneseq
        %v441 = vshrl.u32 %v440, 7
        %v442 = vsub.s32 0, %v441
        %v443 = vrot.slane %v438, %v442
        %v445 = vpack.i.b16 %v386, %v386
        %v447 = vlaneseq
        %v448 = vshrl.u32 %v447, 7
        %v449 = vsub.s32 0, %v448
        %v450 = vrot.slane %v445, %v449
        %v452 = vpack.i.b16 %v401, %v401
        %v454 = vlaneseq
        %v455 = vshrl.u32 %v454, 7
        %v456 = vsub.s32 0, %v455
        %v457 = vrot.slane %v452, %v456
        %v459 = vpack.i.b16 %v408, %v408
        %v461 = vlaneseq
        %v462 = vshrl.u32 %v461, 7
        %v463 = vsub.s32 0, %v462
        %v464 = vrot.slane %v459, %v463
        %v473 = vunpack.c.l.b16 %v415
        %v474 = vunpack.c.l.b16 %v422
        %v475 = vunpack.c.l.b16 %v429
        %v476 = vunpack.c.l.b16 %v436
        %v477 = vunpack.c.l.b16 %v443
        %v478 = vunpack.c.l.b16 %v450
        %v479 = vunpack.c.l.b16 %v457
        %v480 = vunpack.c.l.b16 %v464
        %v481 = vpack.c.b16 %v474, %v473
        %v482 = vpack.c.b16 %v476, %v475
        %v483 = vpack.c.b16 %v478, %v477
        %v484 = vpack.c.b16 %v480, %v479
        %v489 = vmul.bf16 %v249, %v481
        %v490 = vmul.bf16 %v250, %v481
        %v491 = vmul.bf16 %v251, %v481
        %v492 = vmul.bf16 %v252, %v481
        %v493 = vmul.bf16 %v253, %v481
        %v494 = vmul.bf16 %v254, %v481
        %v495 = vmul.bf16 %v255, %v481
        %v496 = vmul.bf16 %v256, %v481
        %v497 = vmul.bf16 %v257, %v481
        %v498 = vmul.bf16 %v258, %v481
        %v499 = vmul.bf16 %v259, %v481
        %v500 = vmul.bf16 %v260, %v481
        %v501 = vmul.bf16 %v261, %v481
        %v502 = vmul.bf16 %v262, %v481
        %v503 = vmul.bf16 %v263, %v481
        %v504 = vmul.bf16 %v264, %v481
        %v505 = vmul.bf16 %v265, %v482
        %v506 = vmul.bf16 %v266, %v482
        %v507 = vmul.bf16 %v267, %v482
        %v508 = vmul.bf16 %v268, %v482
        %v509 = vmul.bf16 %v269, %v482
        %v510 = vmul.bf16 %v270, %v482
        %v511 = vmul.bf16 %v271, %v482
        %v512 = vmul.bf16 %v272, %v482
        %v513 = vmul.bf16 %v273, %v482
        %v514 = vmul.bf16 %v274, %v482
        %v515 = vmul.bf16 %v275, %v482
        %v516 = vmul.bf16 %v276, %v482
        %v517 = vmul.bf16 %v277, %v482
        %v518 = vmul.bf16 %v278, %v482
        %v519 = vmul.bf16 %v279, %v482
        %v520 = vmul.bf16 %v280, %v482
        %v521 = vmul.bf16 %v281, %v483
        %v522 = vmul.bf16 %v282, %v483
        %v523 = vmul.bf16 %v283, %v483
        %v524 = vmul.bf16 %v284, %v483
        %v525 = vmul.bf16 %v285, %v483
        %v526 = vmul.bf16 %v286, %v483
        %v527 = vmul.bf16 %v287, %v483
        %v528 = vmul.bf16 %v288, %v483
        %v529 = vmul.bf16 %v289, %v483
        %v530 = vmul.bf16 %v290, %v483
        %v531 = vmul.bf16 %v291, %v483
        %v532 = vmul.bf16 %v292, %v483
        %v533 = vmul.bf16 %v293, %v483
        %v534 = vmul.bf16 %v294, %v483
        %v535 = vmul.bf16 %v295, %v483
        %v536 = vmul.bf16 %v296, %v483
        %v537 = vmul.bf16 %v297, %v484
        %v538 = vmul.bf16 %v298, %v484
        %v539 = vmul.bf16 %v299, %v484
        %v540 = vmul.bf16 %v300, %v484
        %v541 = vmul.bf16 %v301, %v484
        %v542 = vmul.bf16 %v302, %v484
        %v543 = vmul.bf16 %v303, %v484
        %v544 = vmul.bf16 %v304, %v484
        %v545 = vmul.bf16 %v305, %v484
        %v546 = vmul.bf16 %v306, %v484
        %v547 = vmul.bf16 %v307, %v484
        %v548 = vmul.bf16 %v308, %v484
        %v549 = vmul.bf16 %v309, %v484
        %v550 = vmul.bf16 %v310, %v484
        %v551 = vmul.bf16 %v311, %v484
        %v552 = vmul.bf16 %v312, %v484
        %v553 = vunpack.c.l.bf16 %v489
        %v554 = vunpack.c.h.bf16 %v489
        %v555 = vunpack.c.l.bf16 %v490
        %v556 = vunpack.c.h.bf16 %v490
        %v557 = vunpack.c.l.bf16 %v491
        %v558 = vunpack.c.h.bf16 %v491
        %v559 = vunpack.c.l.bf16 %v492
        %v560 = vunpack.c.h.bf16 %v492
        %v561 = vunpack.c.l.bf16 %v493
        %v562 = vunpack.c.h.bf16 %v493
        %v563 = vunpack.c.l.bf16 %v494
        %v564 = vunpack.c.h.bf16 %v494
        %v565 = vunpack.c.l.bf16 %v495
        %v566 = vunpack.c.h.bf16 %v495
        %v567 = vunpack.c.l.bf16 %v496
        %v568 = vunpack.c.h.bf16 %v496
        %v569 = vunpack.c.l.bf16 %v497
        %v570 = vunpack.c.h.bf16 %v497
        %v571 = vunpack.c.l.bf16 %v498
        %v572 = vunpack.c.h.bf16 %v498
        %v573 = vunpack.c.l.bf16 %v499
        %v574 = vunpack.c.h.bf16 %v499
        %v575 = vunpack.c.l.bf16 %v500
        %v576 = vunpack.c.h.bf16 %v500
        %v577 = vunpack.c.l.bf16 %v501
        %v578 = vunpack.c.h.bf16 %v501
        %v579 = vunpack.c.l.bf16 %v502
        %v580 = vunpack.c.h.bf16 %v502
        %v581 = vunpack.c.l.bf16 %v503
        %v582 = vunpack.c.h.bf16 %v503
        %v583 = vunpack.c.l.bf16 %v504
        %v584 = vunpack.c.h.bf16 %v504
        %v585 = vunpack.c.l.bf16 %v505
        %v586 = vunpack.c.h.bf16 %v505
        %v587 = vunpack.c.l.bf16 %v506
        %v588 = vunpack.c.h.bf16 %v506
        %v589 = vunpack.c.l.bf16 %v507
        %v590 = vunpack.c.h.bf16 %v507
        %v591 = vunpack.c.l.bf16 %v508
        %v592 = vunpack.c.h.bf16 %v508
        %v593 = vunpack.c.l.bf16 %v509
        %v594 = vunpack.c.h.bf16 %v509
        %v595 = vunpack.c.l.bf16 %v510
        %v596 = vunpack.c.h.bf16 %v510
        %v597 = vunpack.c.l.bf16 %v511
        %v598 = vunpack.c.h.bf16 %v511
        %v599 = vunpack.c.l.bf16 %v512
        %v600 = vunpack.c.h.bf16 %v512
        %v601 = vunpack.c.l.bf16 %v513
        %v602 = vunpack.c.h.bf16 %v513
        %v603 = vunpack.c.l.bf16 %v514
        %v604 = vunpack.c.h.bf16 %v514
        %v605 = vunpack.c.l.bf16 %v515
        %v606 = vunpack.c.h.bf16 %v515
        %v607 = vunpack.c.l.bf16 %v516
        %v608 = vunpack.c.h.bf16 %v516
        %v609 = vunpack.c.l.bf16 %v517
        %v610 = vunpack.c.h.bf16 %v517
        %v611 = vunpack.c.l.bf16 %v518
        %v612 = vunpack.c.h.bf16 %v518
        %v613 = vunpack.c.l.bf16 %v519
        %v614 = vunpack.c.h.bf16 %v519
        %v615 = vunpack.c.l.bf16 %v520
        %v616 = vunpack.c.h.bf16 %v520
        %v617 = vunpack.c.l.bf16 %v521
        %v618 = vunpack.c.h.bf16 %v521
        %v619 = vunpack.c.l.bf16 %v522
        %v620 = vunpack.c.h.bf16 %v522
        %v621 = vunpack.c.l.bf16 %v523
        %v622 = vunpack.c.h.bf16 %v523
        %v623 = vunpack.c.l.bf16 %v524
        %v624 = vunpack.c.h.bf16 %v524
        %v625 = vunpack.c.l.bf16 %v525
        %v626 = vunpack.c.h.bf16 %v525
        %v627 = vunpack.c.l.bf16 %v526
        %v628 = vunpack.c.h.bf16 %v526
        %v629 = vunpack.c.l.bf16 %v527
        %v630 = vunpack.c.h.bf16 %v527
        %v631 = vunpack.c.l.bf16 %v528
        %v632 = vunpack.c.h.bf16 %v528
        %v633 = vunpack.c.l.bf16 %v529
        %v634 = vunpack.c.h.bf16 %v529
        %v635 = vunpack.c.l.bf16 %v530
        %v636 = vunpack.c.h.bf16 %v530
        %v637 = vunpack.c.l.bf16 %v531
        %v638 = vunpack.c.h.bf16 %v531
        %v639 = vunpack.c.l.bf16 %v532
        %v640 = vunpack.c.h.bf16 %v532
        %v641 = vunpack.c.l.bf16 %v533
        %v642 = vunpack.c.h.bf16 %v533
        %v643 = vunpack.c.l.bf16 %v534
        %v644 = vunpack.c.h.bf16 %v534
        %v645 = vunpack.c.l.bf16 %v535
        %v646 = vunpack.c.h.bf16 %v535
        %v647 = vunpack.c.l.bf16 %v536
        %v648 = vunpack.c.h.bf16 %v536
        %v649 = vunpack.c.l.bf16 %v537
        %v650 = vunpack.c.h.bf16 %v537
        %v651 = vunpack.c.l.bf16 %v538
        %v652 = vunpack.c.h.bf16 %v538
        %v653 = vunpack.c.l.bf16 %v539
        %v654 = vunpack.c.h.bf16 %v539
        %v655 = vunpack.c.l.bf16 %v540
        %v656 = vunpack.c.h.bf16 %v540
        %v657 = vunpack.c.l.bf16 %v541
        %v658 = vunpack.c.h.bf16 %v541
        %v659 = vunpack.c.l.bf16 %v542
        %v660 = vunpack.c.h.bf16 %v542
        %v661 = vunpack.c.l.bf16 %v543
        %v662 = vunpack.c.h.bf16 %v543
        %v663 = vunpack.c.l.bf16 %v544
        %v664 = vunpack.c.h.bf16 %v544
        %v665 = vunpack.c.l.bf16 %v545
        %v666 = vunpack.c.h.bf16 %v545
        %v667 = vunpack.c.l.bf16 %v546
        %v668 = vunpack.c.h.bf16 %v546
        %v669 = vunpack.c.l.bf16 %v547
        %v670 = vunpack.c.h.bf16 %v547
        %v671 = vunpack.c.l.bf16 %v548
        %v672 = vunpack.c.h.bf16 %v548
        %v673 = vunpack.c.l.bf16 %v549
        %v674 = vunpack.c.h.bf16 %v549
        %v675 = vunpack.c.l.bf16 %v550
        %v676 = vunpack.c.h.bf16 %v550
        %v677 = vunpack.c.l.bf16 %v551
        %v678 = vunpack.c.h.bf16 %v551
        %v679 = vunpack.c.l.bf16 %v552
        %v680 = vunpack.c.h.bf16 %v552
        %v681 = vadd.f32 %v553, %v554
        %682 = vadd.xlane.f32.xlu0 %v681
        %v683 = vpop.xlane.xlu0 %682
        %v684 = vadd.f32 %v555, %v556
        %685 = vadd.xlane.f32.xlu0 %v684
        %v686 = vpop.xlane.xlu0 %685
        %v687 = vadd.f32 %v557, %v558
        %688 = vadd.xlane.f32.xlu0 %v687
        %v689 = vpop.xlane.xlu0 %688
        %v690 = vadd.f32 %v559, %v560
        %691 = vadd.xlane.f32.xlu0 %v690
        %v692 = vpop.xlane.xlu0 %691
        %v693 = vadd.f32 %v561, %v562
        %694 = vadd.xlane.f32.xlu0 %v693
        %v695 = vpop.xlane.xlu0 %694
        %v696 = vadd.f32 %v563, %v564
        %697 = vadd.xlane.f32.xlu0 %v696
        %v698 = vpop.xlane.xlu0 %697
        %v699 = vadd.f32 %v565, %v566
        %700 = vadd.xlane.f32.xlu0 %v699
        %v701 = vpop.xlane.xlu0 %700
        %v702 = vadd.f32 %v567, %v568
        %703 = vadd.xlane.f32.xlu0 %v702
        %v704 = vpop.xlane.xlu0 %703
        %v705 = vadd.f32 %v569, %v570
        %706 = vadd.xlane.f32.xlu0 %v705
        %v707 = vpop.xlane.xlu0 %706
        %v708 = vadd.f32 %v571, %v572
        %709 = vadd.xlane.f32.xlu0 %v708
        %v710 = vpop.xlane.xlu0 %709
        %v711 = vadd.f32 %v573, %v574
        %712 = vadd.xlane.f32.xlu0 %v711
        %v713 = vpop.xlane.xlu0 %712
        %v714 = vadd.f32 %v575, %v576
        %715 = vadd.xlane.f32.xlu0 %v714
        %v716 = vpop.xlane.xlu0 %715
        %v717 = vadd.f32 %v577, %v578
        %718 = vadd.xlane.f32.xlu0 %v717
        %v719 = vpop.xlane.xlu0 %718
        %v720 = vadd.f32 %v579, %v580
        %721 = vadd.xlane.f32.xlu0 %v720
        %v722 = vpop.xlane.xlu0 %721
        %v723 = vadd.f32 %v581, %v582
        %724 = vadd.xlane.f32.xlu0 %v723
        %v725 = vpop.xlane.xlu0 %724
        %v726 = vadd.f32 %v583, %v584
        %727 = vadd.xlane.f32.xlu0 %v726
        %v728 = vpop.xlane.xlu0 %727
        %v729 = vadd.f32 %v585, %v586
        %730 = vadd.xlane.f32.xlu0 %v729
        %v731 = vpop.xlane.xlu0 %730
        %v732 = vadd.f32 %v587, %v588
        %733 = vadd.xlane.f32.xlu0 %v732
        %v734 = vpop.xlane.xlu0 %733
        %v735 = vadd.f32 %v589, %v590
        %736 = vadd.xlane.f32.xlu0 %v735
        %v737 = vpop.xlane.xlu0 %736
        %v738 = vadd.f32 %v591, %v592
        %739 = vadd.xlane.f32.xlu0 %v738
        %v740 = vpop.xlane.xlu0 %739
        %v741 = vadd.f32 %v593, %v594
        %742 = vadd.xlane.f32.xlu0 %v741
        %v743 = vpop.xlane.xlu0 %742
        %v744 = vadd.f32 %v595, %v596
        %745 = vadd.xlane.f32.xlu0 %v744
        %v746 = vpop.xlane.xlu0 %745
        %v747 = vadd.f32 %v597, %v598
        %748 = vadd.xlane.f32.xlu0 %v747
        %v749 = vpop.xlane.xlu0 %748
        %v750 = vadd.f32 %v599, %v600
        %751 = vadd.xlane.f32.xlu0 %v750
        %v752 = vpop.xlane.xlu0 %751
        %v753 = vadd.f32 %v601, %v602
        %754 = vadd.xlane.f32.xlu0 %v753
        %v755 = vpop.xlane.xlu0 %754
        %v756 = vadd.f32 %v603, %v604
        %757 = vadd.xlane.f32.xlu0 %v756
        %v758 = vpop.xlane.xlu0 %757
        %v759 = vadd.f32 %v605, %v606
        %760 = vadd.xlane.f32.xlu0 %v759
        %v761 = vpop.xlane.xlu0 %760
        %v762 = vadd.f32 %v607, %v608
        %763 = vadd.xlane.f32.xlu0 %v762
        %v764 = vpop.xlane.xlu0 %763
        %v765 = vadd.f32 %v609, %v610
        %766 = vadd.xlane.f32.xlu0 %v765
        %v767 = vpop.xlane.xlu0 %766
        %v768 = vadd.f32 %v611, %v612
        %769 = vadd.xlane.f32.xlu0 %v768
        %v770 = vpop.xlane.xlu0 %769
        %v771 = vadd.f32 %v613, %v614
        %772 = vadd.xlane.f32.xlu0 %v771
        %v773 = vpop.xlane.xlu0 %772
        %v774 = vadd.f32 %v615, %v616
        %775 = vadd.xlane.f32.xlu0 %v774
        %v776 = vpop.xlane.xlu0 %775
        %v777 = vadd.f32 %v617, %v618
        %778 = vadd.xlane.f32.xlu0 %v777
        %v779 = vpop.xlane.xlu0 %778
        %v780 = vadd.f32 %v619, %v620
        %781 = vadd.xlane.f32.xlu0 %v780
        %v782 = vpop.xlane.xlu0 %781
        %v783 = vadd.f32 %v621, %v622
        %784 = vadd.xlane.f32.xlu0 %v783
        %v785 = vpop.xlane.xlu0 %784
        %v786 = vadd.f32 %v623, %v624
        %787 = vadd.xlane.f32.xlu0 %v786
        %v788 = vpop.xlane.xlu0 %787
        %v789 = vadd.f32 %v625, %v626
        %790 = vadd.xlane.f32.xlu0 %v789
        %v791 = vpop.xlane.xlu0 %790
        %v792 = vadd.f32 %v627, %v628
        %793 = vadd.xlane.f32.xlu0 %v792
        %v794 = vpop.xlane.xlu0 %793
        %v795 = vadd.f32 %v629, %v630
        %796 = vadd.xlane.f32.xlu0 %v795
        %v797 = vpop.xlane.xlu0 %796
        %v798 = vadd.f32 %v631, %v632
        %799 = vadd.xlane.f32.xlu0 %v798
        %v800 = vpop.xlane.xlu0 %799
        %v801 = vadd.f32 %v633, %v634
        %802 = vadd.xlane.f32.xlu0 %v801
        %v803 = vpop.xlane.xlu0 %802
        %v804 = vadd.f32 %v635, %v636
        %805 = vadd.xlane.f32.xlu0 %v804
        %v806 = vpop.xlane.xlu0 %805
        %v807 = vadd.f32 %v637, %v638
        %808 = vadd.xlane.f32.xlu0 %v807
        %v809 = vpop.xlane.xlu0 %808
        %v810 = vadd.f32 %v639, %v640
        %811 = vadd.xlane.f32.xlu0 %v810
        %v812 = vpop.xlane.xlu0 %811
        %v813 = vadd.f32 %v641, %v642
        %814 = vadd.xlane.f32.xlu0 %v813
        %v815 = vpop.xlane.xlu0 %814
        %v816 = vadd.f32 %v643, %v644
        %817 = vadd.xlane.f32.xlu0 %v816
        %v818 = vpop.xlane.xlu0 %817
        %v819 = vadd.f32 %v645, %v646
        %820 = vadd.xlane.f32.xlu0 %v819
        %v821 = vpop.xlane.xlu0 %820
        %v822 = vadd.f32 %v647, %v648
        %823 = vadd.xlane.f32.xlu0 %v822
        %v824 = vpop.xlane.xlu0 %823
        %v825 = vadd.f32 %v649, %v650
        %826 = vadd.xlane.f32.xlu0 %v825
        %v827 = vpop.xlane.xlu0 %826
        %v828 = vadd.f32 %v651, %v652
        %829 = vadd.xlane.f32.xlu0 %v828
        %v830 = vpop.xlane.xlu0 %829
        %v831 = vadd.f32 %v653, %v654
        %832 = vadd.xlane.f32.xlu0 %v831
        %v833 = vpop.xlane.xlu0 %832
        %v834 = vadd.f32 %v655, %v656
        %835 = vadd.xlane.f32.xlu0 %v834
        %v836 = vpop.xlane.xlu0 %835
        %v837 = vadd.f32 %v657, %v658
        %838 = vadd.xlane.f32.xlu0 %v837
        %v839 = vpop.xlane.xlu0 %838
        %v840 = vadd.f32 %v659, %v660
        %841 = vadd.xlane.f32.xlu0 %v840
        %v842 = vpop.xlane.xlu0 %841
        %v843 = vadd.f32 %v661, %v662
        %844 = vadd.xlane.f32.xlu0 %v843
        %v845 = vpop.xlane.xlu0 %844
        %v846 = vadd.f32 %v663, %v664
        %847 = vadd.xlane.f32.xlu0 %v846
        %v848 = vpop.xlane.xlu0 %847
        %v849 = vadd.f32 %v665, %v666
        %850 = vadd.xlane.f32.xlu0 %v849
        %v851 = vpop.xlane.xlu0 %850
        %v852 = vadd.f32 %v667, %v668
        %853 = vadd.xlane.f32.xlu0 %v852
        %v854 = vpop.xlane.xlu0 %853
        %v855 = vadd.f32 %v669, %v670
        %856 = vadd.xlane.f32.xlu0 %v855
        %v857 = vpop.xlane.xlu0 %856
        %v858 = vadd.f32 %v671, %v672
        %859 = vadd.xlane.f32.xlu0 %v858
        %v860 = vpop.xlane.xlu0 %859
        %v861 = vadd.f32 %v673, %v674
        %862 = vadd.xlane.f32.xlu0 %v861
        %v863 = vpop.xlane.xlu0 %862
        %v864 = vadd.f32 %v675, %v676
        %865 = vadd.xlane.f32.xlu0 %v864
        %v866 = vpop.xlane.xlu0 %865
        %v867 = vadd.f32 %v677, %v678
        %868 = vadd.xlane.f32.xlu0 %v867
        %v869 = vpop.xlane.xlu0 %868
        %v870 = vadd.f32 %v679, %v680
        %871 = vadd.xlane.f32.xlu0 %v870
        %v872 = vpop.xlane.xlu0 %871
        %v873 = vld [vmem:[%s246] sm:$0x1]
        %v874 = vld [vmem:[%s246 + $0x1] sm:$0x1]
        %v875 = vld [vmem:[%s246 + $0x2] sm:$0x1]
        %v876 = vld [vmem:[%s246 + $0x3] sm:$0x1]
        %878 = vset.pattern.permute.xlu0 0
        %879 = vperm.xlu0 %878, %v873
        %v880 = vpop.permute.xlu0 %879
        %v882 = vlaneseq
        %v883 = vshrl.u32 %v882, 7
        %v884 = vsub.s32 0, %v883
        %v885 = vrot.slane %v880, %v884
        %887 = vset.pattern.permute.xlu0 0
        %888 = vperm.xlu0 %887, %v874
        %v889 = vpop.permute.xlu0 %888
        %v891 = vlaneseq
        %v892 = vshrl.u32 %v891, 7
        %v893 = vsub.s32 0, %v892
        %v894 = vrot.slane %v889, %v893
        %896 = vset.pattern.permute.xlu0 0
        %897 = vperm.xlu0 %896, %v875
        %v898 = vpop.permute.xlu0 %897
        %v900 = vlaneseq
        %v901 = vshrl.u32 %v900, 7
        %v902 = vsub.s32 0, %v901
        %v903 = vrot.slane %v898, %v902
        %905 = vset.pattern.permute.xlu0 0
        %906 = vperm.xlu0 %905, %v876
        %v907 = vpop.permute.xlu0 %906
        %v909 = vlaneseq
        %v910 = vshrl.u32 %v909, 7
        %v911 = vsub.s32 0, %v910
        %v912 = vrot.slane %v907, %v911
        %v913 = vadd.f32 %v683, %v885
        %v914 = vadd.f32 %v686, %v885
        %v915 = vadd.f32 %v689, %v885
        %v916 = vadd.f32 %v692, %v885
        %v917 = vadd.f32 %v695, %v885
        %v918 = vadd.f32 %v698, %v885
        %v919 = vadd.f32 %v701, %v885
        %v920 = vadd.f32 %v704, %v885
        %v921 = vadd.f32 %v707, %v885
        %v922 = vadd.f32 %v710, %v885
        %v923 = vadd.f32 %v713, %v885
        %v924 = vadd.f32 %v716, %v885
        %v925 = vadd.f32 %v719, %v885
        %v926 = vadd.f32 %v722, %v885
        %v927 = vadd.f32 %v725, %v885
        %v928 = vadd.f32 %v728, %v885
        %v929 = vadd.f32 %v731, %v894
        %v930 = vadd.f32 %v734, %v894
        %v931 = vadd.f32 %v737, %v894
        %v932 = vadd.f32 %v740, %v894
        %v933 = vadd.f32 %v743, %v894
        %v934 = vadd.f32 %v746, %v894
        %v935 = vadd.f32 %v749, %v894
        %v936 = vadd.f32 %v752, %v894
        %v937 = vadd.f32 %v755, %v894
        %v938 = vadd.f32 %v758, %v894
        %v939 = vadd.f32 %v761, %v894
        %v940 = vadd.f32 %v764, %v894
        %v941 = vadd.f32 %v767, %v894
        %v942 = vadd.f32 %v770, %v894
        %v943 = vadd.f32 %v773, %v894
        %v944 = vadd.f32 %v776, %v894
        %v945 = vadd.f32 %v779, %v903
        %v946 = vadd.f32 %v782, %v903
        %v947 = vadd.f32 %v785, %v903
        %v948 = vadd.f32 %v788, %v903
        %v949 = vadd.f32 %v791, %v903
        %v950 = vadd.f32 %v794, %v903
        %v951 = vadd.f32 %v797, %v903
        %v952 = vadd.f32 %v800, %v903
        %v953 = vadd.f32 %v803, %v903
        %v954 = vadd.f32 %v806, %v903
        %v955 = vadd.f32 %v809, %v903
        %v956 = vadd.f32 %v812, %v903
        %v957 = vadd.f32 %v815, %v903
        %v958 = vadd.f32 %v818, %v903
        %v959 = vadd.f32 %v821, %v903
        %v960 = vadd.f32 %v824, %v903
        %v961 = vadd.f32 %v827, %v912
        %v962 = vadd.f32 %v830, %v912
        %v963 = vadd.f32 %v833, %v912
        %v964 = vadd.f32 %v836, %v912
        %v965 = vadd.f32 %v839, %v912
        %v966 = vadd.f32 %v842, %v912
        %v967 = vadd.f32 %v845, %v912
        %v968 = vadd.f32 %v848, %v912
        %v969 = vadd.f32 %v851, %v912
        %v970 = vadd.f32 %v854, %v912
        %v971 = vadd.f32 %v857, %v912
        %v972 = vadd.f32 %v860, %v912
        %v973 = vadd.f32 %v863, %v912
        %v974 = vadd.f32 %v866, %v912
        %v975 = vadd.f32 %v869, %v912
        %v976 = vadd.f32 %v872, %v912
        %v1041 = vlaneseq
        %v1042 = vand.u32 %v1041, 127
        %v1043 = vlaneseq
        %v1044 = vshrl.u32 %v1043, 7
        %v1045 = vsub.s32 %v1042, %v1044
        %v1046 = vrot.slane %v913, %v1045
        %v1047 = vadd.s32 %v1042, 4294967288
        %v1048 = vlaneseq
        %v1049 = vshrl.u32 %v1048, 7
        %v1050 = vsub.s32 %v1047, %v1049
        %v1051 = vrot.slane %v914, %v1050
        %vm1052 = vcmask 130112
        %v1053 = vsel %vm1052, %v1051, %v1046
        %v1054 = vadd.s32 %v1042, 4294967280
        %v1055 = vlaneseq
        %v1056 = vshrl.u32 %v1055, 7
        %v1057 = vsub.s32 %v1054, %v1056
        %v1058 = vrot.slane %v915, %v1057
        %vm1059 = vcmask 195712
        %v1060 = vsel %vm1059, %v1058, %v1053
        %v1061 = vadd.s32 %v1042, 4294967272
        %v1062 = vlaneseq
        %v1063 = vshrl.u32 %v1062, 7
        %v1064 = vsub.s32 %v1061, %v1063
        %v1065 = vrot.slane %v916, %v1064
        %vm1066 = vcmask 261312
        %v1067 = vsel %vm1066, %v1065, %v1060
        %v1068 = vadd.s32 %v1042, 4294967264
        %v1069 = vlaneseq
        %v1070 = vshrl.u32 %v1069, 7
        %v1071 = vsub.s32 %v1068, %v1070
        %v1072 = vrot.slane %v917, %v1071
        %vm1073 = vcmask 326912
        %v1074 = vsel %vm1073, %v1072, %v1067
        %v1075 = vadd.s32 %v1042, 4294967256
        %v1076 = vlaneseq
        %v1077 = vshrl.u32 %v1076, 7
        %v1078 = vsub.s32 %v1075, %v1077
        %v1079 = vrot.slane %v918, %v1078
        %vm1080 = vcmask 392512
        %v1081 = vsel %vm1080, %v1079, %v1074
        %v1082 = vadd.s32 %v1042, 4294967248
        %v1083 = vlaneseq
        %v1084 = vshrl.u32 %v1083, 7
        %v1085 = vsub.s32 %v1082, %v1084
        %v1086 = vrot.slane %v919, %v1085
        %vm1087 = vcmask 458112
        %v1088 = vsel %vm1087, %v1086, %v1081
        %v1089 = vadd.s32 %v1042, 4294967240
        %v1090 = vlaneseq
        %v1091 = vshrl.u32 %v1090, 7
        %v1092 = vsub.s32 %v1089, %v1091
        %v1093 = vrot.slane %v920, %v1092
        %vm1094 = vcmask 523712
        %v1095 = vsel %vm1094, %v1093, %v1088
        %v1096 = vadd.s32 %v1042, 4294967232
        %v1097 = vlaneseq
        %v1098 = vshrl.u32 %v1097, 7
        %v1099 = vsub.s32 %v1096, %v1098
        %v1100 = vrot.slane %v921, %v1099
        %vm1101 = vcmask 589312
        %v1102 = vsel %vm1101, %v1100, %v1095
        %v1103 = vadd.s32 %v1042, 4294967224
        %v1104 = vlaneseq
        %v1105 = vshrl.u32 %v1104, 7
        %v1106 = vsub.s32 %v1103, %v1105
        %v1107 = vrot.slane %v922, %v1106
        %vm1108 = vcmask 654912
        %v1109 = vsel %vm1108, %v1107, %v1102
        %v1110 = vadd.s32 %v1042, 4294967216
        %v1111 = vlaneseq
        %v1112 = vshrl.u32 %v1111, 7
        %v1113 = vsub.s32 %v1110, %v1112
        %v1114 = vrot.slane %v923, %v1113
        %vm1115 = vcmask 720512
        %v1116 = vsel %vm1115, %v1114, %v1109
        %v1117 = vadd.s32 %v1042, 4294967208
        %v1118 = vlaneseq
        %v1119 = vshrl.u32 %v1118, 7
        %v1120 = vsub.s32 %v1117, %v1119
        %v1121 = vrot.slane %v924, %v1120
        %vm1122 = vcmask 786112
        %v1123 = vsel %vm1122, %v1121, %v1116
        %v1124 = vadd.s32 %v1042, 4294967200
        %v1125 = vlaneseq
        %v1126 = vshrl.u32 %v1125, 7
        %v1127 = vsub.s32 %v1124, %v1126
        %v1128 = vrot.slane %v925, %v1127
        %vm1129 = vcmask 851712
        %v1130 = vsel %vm1129, %v1128, %v1123
        %v1131 = vadd.s32 %v1042, 4294967192
        %v1132 = vlaneseq
        %v1133 = vshrl.u32 %v1132, 7
        %v1134 = vsub.s32 %v1131, %v1133
        %v1135 = vrot.slane %v926, %v1134
        %vm1136 = vcmask 917312
        %v1137 = vsel %vm1136, %v1135, %v1130
        %v1138 = vadd.s32 %v1042, 4294967184
        %v1139 = vlaneseq
        %v1140 = vshrl.u32 %v1139, 7
        %v1141 = vsub.s32 %v1138, %v1140
        %v1142 = vrot.slane %v927, %v1141
        %vm1143 = vcmask 982912
        %v1144 = vsel %vm1143, %v1142, %v1137
        %v1145 = vadd.s32 %v1042, 4294967176
        %v1146 = vlaneseq
        %v1147 = vshrl.u32 %v1146, 7
        %v1148 = vsub.s32 %v1145, %v1147
        %v1149 = vrot.slane %v928, %v1148
        %vm1150 = vcmask 1048512
        %v1151 = vsel %vm1150, %v1149, %v1144
        %v1152 = vlaneseq
        %v1153 = vshrl.u32 %v1152, 7
        %v1154 = vsub.s32 %v1042, %v1153
        %v1155 = vrot.slane %v929, %v1154
        %v1156 = vlaneseq
        %v1157 = vshrl.u32 %v1156, 7
        %v1158 = vsub.s32 %v1047, %v1157
        %v1159 = vrot.slane %v930, %v1158
        %v1160 = vsel %vm1052, %v1159, %v1155
        %v1161 = vlaneseq
        %v1162 = vshrl.u32 %v1161, 7
        %v1163 = vsub.s32 %v1054, %v1162
        %v1164 = vrot.slane %v931, %v1163
        %v1165 = vsel %vm1059, %v1164, %v1160
        %v1166 = vlaneseq
        %v1167 = vshrl.u32 %v1166, 7
        %v1168 = vsub.s32 %v1061, %v1167
        %v1169 = vrot.slane %v932, %v1168
        %v1170 = vsel %vm1066, %v1169, %v1165
        %v1171 = vlaneseq
        %v1172 = vshrl.u32 %v1171, 7
        %v1173 = vsub.s32 %v1068, %v1172
        %v1174 = vrot.slane %v933, %v1173
        %v1175 = vsel %vm1073, %v1174, %v1170
        %v1176 = vlaneseq
        %v1177 = vshrl.u32 %v1176, 7
        %v1178 = vsub.s32 %v1075, %v1177
        %v1179 = vrot.slane %v934, %v1178
        %v1180 = vsel %vm1080, %v1179, %v1175
        %v1181 = vlaneseq
        %v1182 = vshrl.u32 %v1181, 7
        %v1183 = vsub.s32 %v1082, %v1182
        %v1184 = vrot.slane %v935, %v1183
        %v1185 = vsel %vm1087, %v1184, %v1180
        %v1186 = vlaneseq
        %v1187 = vshrl.u32 %v1186, 7
        %v1188 = vsub.s32 %v1089, %v1187
        %v1189 = vrot.slane %v936, %v1188
        %v1190 = vsel %vm1094, %v1189, %v1185
        %v1191 = vlaneseq
        %v1192 = vshrl.u32 %v1191, 7
        %v1193 = vsub.s32 %v1096, %v1192
        %v1194 = vrot.slane %v937, %v1193
        %v1195 = vsel %vm1101, %v1194, %v1190
        %v1196 = vlaneseq
        %v1197 = vshrl.u32 %v1196, 7
        %v1198 = vsub.s32 %v1103, %v1197
        %v1199 = vrot.slane %v938, %v1198
        %v1200 = vsel %vm1108, %v1199, %v1195
        %v1201 = vlaneseq
        %v1202 = vshrl.u32 %v1201, 7
        %v1203 = vsub.s32 %v1110, %v1202
        %v1204 = vrot.slane %v939, %v1203
        %v1205 = vsel %vm1115, %v1204, %v1200
        %v1206 = vlaneseq
        %v1207 = vshrl.u32 %v1206, 7
        %v1208 = vsub.s32 %v1117, %v1207
        %v1209 = vrot.slane %v940, %v1208
        %v1210 = vsel %vm1122, %v1209, %v1205
        %v1211 = vlaneseq
        %v1212 = vshrl.u32 %v1211, 7
        %v1213 = vsub.s32 %v1124, %v1212
        %v1214 = vrot.slane %v941, %v1213
        %v1215 = vsel %vm1129, %v1214, %v1210
        %v1216 = vlaneseq
        %v1217 = vshrl.u32 %v1216, 7
        %v1218 = vsub.s32 %v1131, %v1217
        %v1219 = vrot.slane %v942, %v1218
        %v1220 = vsel %vm1136, %v1219, %v1215
        %v1221 = vlaneseq
        %v1222 = vshrl.u32 %v1221, 7
        %v1223 = vsub.s32 %v1138, %v1222
        %v1224 = vrot.slane %v943, %v1223
        %v1225 = vsel %vm1143, %v1224, %v1220
        %v1226 = vlaneseq
        %v1227 = vshrl.u32 %v1226, 7
        %v1228 = vsub.s32 %v1145, %v1227
        %v1229 = vrot.slane %v944, %v1228
        %v1230 = vsel %vm1150, %v1229, %v1225
        %v1231 = vlaneseq
        %v1232 = vshrl.u32 %v1231, 7
        %v1233 = vsub.s32 %v1042, %v1232
        %v1234 = vrot.slane %v945, %v1233
        %v1235 = vlaneseq
        %v1236 = vshrl.u32 %v1235, 7
        %v1237 = vsub.s32 %v1047, %v1236
        %v1238 = vrot.slane %v946, %v1237
        %v1239 = vsel %vm1052, %v1238, %v1234
        %v1240 = vlaneseq
        %v1241 = vshrl.u32 %v1240, 7
        %v1242 = vsub.s32 %v1054, %v1241
        %v1243 = vrot.slane %v947, %v1242
        %v1244 = vsel %vm1059, %v1243, %v1239
        %v1245 = vlaneseq
        %v1246 = vshrl.u32 %v1245, 7
        %v1247 = vsub.s32 %v1061, %v1246
        %v1248 = vrot.slane %v948, %v1247
        %v1249 = vsel %vm1066, %v1248, %v1244
        %v1250 = vlaneseq
        %v1251 = vshrl.u32 %v1250, 7
        %v1252 = vsub.s32 %v1068, %v1251
        %v1253 = vrot.slane %v949, %v1252
        %v1254 = vsel %vm1073, %v1253, %v1249
        %v1255 = vlaneseq
        %v1256 = vshrl.u32 %v1255, 7
        %v1257 = vsub.s32 %v1075, %v1256
        %v1258 = vrot.slane %v950, %v1257
        %v1259 = vsel %vm1080, %v1258, %v1254
        %v1260 = vlaneseq
        %v1261 = vshrl.u32 %v1260, 7
        %v1262 = vsub.s32 %v1082, %v1261
        %v1263 = vrot.slane %v951, %v1262
        %v1264 = vsel %vm1087, %v1263, %v1259
        %v1265 = vlaneseq
        %v1266 = vshrl.u32 %v1265, 7
        %v1267 = vsub.s32 %v1089, %v1266
        %v1268 = vrot.slane %v952, %v1267
        %v1269 = vsel %vm1094, %v1268, %v1264
        %v1270 = vlaneseq
        %v1271 = vshrl.u32 %v1270, 7
        %v1272 = vsub.s32 %v1096, %v1271
        %v1273 = vrot.slane %v953, %v1272
        %v1274 = vsel %vm1101, %v1273, %v1269
        %v1275 = vlaneseq
        %v1276 = vshrl.u32 %v1275, 7
        %v1277 = vsub.s32 %v1103, %v1276
        %v1278 = vrot.slane %v954, %v1277
        %v1279 = vsel %vm1108, %v1278, %v1274
        %v1280 = vlaneseq
        %v1281 = vshrl.u32 %v1280, 7
        %v1282 = vsub.s32 %v1110, %v1281
        %v1283 = vrot.slane %v955, %v1282
        %v1284 = vsel %vm1115, %v1283, %v1279
        %v1285 = vlaneseq
        %v1286 = vshrl.u32 %v1285, 7
        %v1287 = vsub.s32 %v1117, %v1286
        %v1288 = vrot.slane %v956, %v1287
        %v1289 = vsel %vm1122, %v1288, %v1284
        %v1290 = vlaneseq
        %v1291 = vshrl.u32 %v1290, 7
        %v1292 = vsub.s32 %v1124, %v1291
        %v1293 = vrot.slane %v957, %v1292
        %v1294 = vsel %vm1129, %v1293, %v1289
        %v1295 = vlaneseq
        %v1296 = vshrl.u32 %v1295, 7
        %v1297 = vsub.s32 %v1131, %v1296
        %v1298 = vrot.slane %v958, %v1297
        %v1299 = vsel %vm1136, %v1298, %v1294
        %v1300 = vlaneseq
        %v1301 = vshrl.u32 %v1300, 7
        %v1302 = vsub.s32 %v1138, %v1301
        %v1303 = vrot.slane %v959, %v1302
        %v1304 = vsel %vm1143, %v1303, %v1299
        %v1305 = vlaneseq
        %v1306 = vshrl.u32 %v1305, 7
        %v1307 = vsub.s32 %v1145, %v1306
        %v1308 = vrot.slane %v960, %v1307
        %v1309 = vsel %vm1150, %v1308, %v1304
        %v1310 = vlaneseq
        %v1311 = vshrl.u32 %v1310, 7
        %v1312 = vsub.s32 %v1042, %v1311
        %v1313 = vrot.slane %v961, %v1312
        %v1314 = vlaneseq
        %v1315 = vshrl.u32 %v1314, 7
        %v1316 = vsub.s32 %v1047, %v1315
        %v1317 = vrot.slane %v962, %v1316
        %v1318 = vsel %vm1052, %v1317, %v1313
        %v1319 = vlaneseq
        %v1320 = vshrl.u32 %v1319, 7
        %v1321 = vsub.s32 %v1054, %v1320
        %v1322 = vrot.slane %v963, %v1321
        %v1323 = vsel %vm1059, %v1322, %v1318
        %v1324 = vlaneseq
        %v1325 = vshrl.u32 %v1324, 7
        %v1326 = vsub.s32 %v1061, %v1325
        %v1327 = vrot.slane %v964, %v1326
        %v1328 = vsel %vm1066, %v1327, %v1323
        %v1329 = vlaneseq
        %v1330 = vshrl.u32 %v1329, 7
        %v1331 = vsub.s32 %v1068, %v1330
        %v1332 = vrot.slane %v965, %v1331
        %v1333 = vsel %vm1073, %v1332, %v1328
        %v1334 = vlaneseq
        %v1335 = vshrl.u32 %v1334, 7
        %v1336 = vsub.s32 %v1075, %v1335
        %v1337 = vrot.slane %v966, %v1336
        %v1338 = vsel %vm1080, %v1337, %v1333
        %v1339 = vlaneseq
        %v1340 = vshrl.u32 %v1339, 7
        %v1341 = vsub.s32 %v1082, %v1340
        %v1342 = vrot.slane %v967, %v1341
        %v1343 = vsel %vm1087, %v1342, %v1338
        %v1344 = vlaneseq
        %v1345 = vshrl.u32 %v1344, 7
        %v1346 = vsub.s32 %v1089, %v1345
        %v1347 = vrot.slane %v968, %v1346
        %v1348 = vsel %vm1094, %v1347, %v1343
        %v1349 = vlaneseq
        %v1350 = vshrl.u32 %v1349, 7
        %v1351 = vsub.s32 %v1096, %v1350
        %v1352 = vrot.slane %v969, %v1351
        %v1353 = vsel %vm1101, %v1352, %v1348
        %v1354 = vlaneseq
        %v1355 = vshrl.u32 %v1354, 7
        %v1356 = vsub.s32 %v1103, %v1355
        %v1357 = vrot.slane %v970, %v1356
        %v1358 = vsel %vm1108, %v1357, %v1353
        %v1359 = vlaneseq
        %v1360 = vshrl.u32 %v1359, 7
        %v1361 = vsub.s32 %v1110, %v1360
        %v1362 = vrot.slane %v971, %v1361
        %v1363 = vsel %vm1115, %v1362, %v1358
        %v1364 = vlaneseq
        %v1365 = vshrl.u32 %v1364, 7
        %v1366 = vsub.s32 %v1117, %v1365
        %v1367 = vrot.slane %v972, %v1366
        %v1368 = vsel %vm1122, %v1367, %v1363
        %v1369 = vlaneseq
        %v1370 = vshrl.u32 %v1369, 7
        %v1371 = vsub.s32 %v1124, %v1370
        %v1372 = vrot.slane %v973, %v1371
        %v1373 = vsel %vm1129, %v1372, %v1368
        %v1374 = vlaneseq
        %v1375 = vshrl.u32 %v1374, 7
        %v1376 = vsub.s32 %v1131, %v1375
        %v1377 = vrot.slane %v974, %v1376
        %v1378 = vsel %vm1136, %v1377, %v1373
        %v1379 = vlaneseq
        %v1380 = vshrl.u32 %v1379, 7
        %v1381 = vsub.s32 %v1138, %v1380
        %v1382 = vrot.slane %v975, %v1381
        %v1383 = vsel %vm1143, %v1382, %v1378
        %v1384 = vlaneseq
        %v1385 = vshrl.u32 %v1384, 7
        %v1386 = vsub.s32 %v1145, %v1385
        %v1387 = vrot.slane %v976, %v1386
        %v1388 = vsel %vm1150, %v1387, %v1383
        %1393 = vst [vmem:[%s223] sm:$0x1] %v1151
        %1394 = vst [vmem:[%s223 + $0x1] sm:$0x1] %v1230
        %1395 = vst [vmem:[%s223 + $0x2] sm:$0x1] %v1309
        %1396 = vst [vmem:[%s223 + $0x3] sm:$0x1] %v1388
        %s1397 = sand.u32 %s119, 1
        %s1398 = scalar_lea.sflag [#allocation3], %s1397
        %s1399 = sand.u32 %s119, 1
        %s1400 = smul.addr %s1399, 4
        %s1401 = scalar_lea.vmem [#allocation2], %s1400
        // Predicated region
        $region33: #{networkv3_forward.1} parent=31 // pred_check
          %p1402 = pneg %p129
        $region34: #{networkv3_forward.1} parent=31 // pred_check_branch
          %1404 = sbr.rel (%p1402) target = $region36
        $region35: #{networkv3_forward.1} parent=31 // pred_region
          %s1405 = smul.u32 4, %s21
          %s1407 = ssub.s32 64, 64
          %1408 = vsyncadd %s1398, %s1407
          %s1409 = sadd.s32 %s22, %s1405
          %s1410 = smul.addr %s1409, 16
          %s1411 = scalar_lea.hbm %s3, %s1410
          %s1412 = sshll.u32 %s1401, 4
          %s1413 = int_to_ptr.vmem [resolvable:$true] %s1412
          %1418 = dma.vmem_to_hbm [thread:$0]  %s1413, 64, %s1411, %s1398, 16, 16, 1
        $region36: #{networkv3_forward.1} parent=31 // pred_fallthru
          _
      $region32: #{networkv3_forward.1} parent=5 // pred_fallthru
        _
      %p1419 = scmp.le.s32.totalorder 2, %s12
      // Predicated region
      $region37: #{networkv3_forward.1} parent=5 // pred_check
        %p1420 = pneg %p1419
      $region38: #{networkv3_forward.1} parent=5 // pred_check_branch
        %1422 = sbr.rel (%p1420) target = $region40
      $region39: #{networkv3_forward.1} parent=5 // pred_region
        %s1423 = ssub.s32 %s12, 2
        // Predicated region
        $region41: #{networkv3_forward.1} parent=39 // pred_check
          %p1424 = pneg %p135
        $region42: #{networkv3_forward.1} parent=39 // pred_check_branch
          %1426 = sbr.rel (%p1424) target = $region44
        $region43: #{networkv3_forward.1} parent=39 // pred_region
          %s1427 = sand.u32 %s120, 1
          %s1428 = scalar_lea.sflag [#allocation3], %s1427
          %s1429 = sand.u32 %s120, 1
          %s1430 = smul.addr %s1429, 4
          %s1431 = scalar_lea.vmem [#allocation2], %s1430
          %1432 = dma.done %s1428, 64
        $region44: #{networkv3_forward.1} parent=39 // pred_fallthru
          _
      $region40: #{networkv3_forward.1} parent=5 // pred_fallthru
        _
    $region6: #{networkv3_forward.1} parent=1 // loop_footer
      %s16 = sadd.s32 1, %s12
    $region7: #{networkv3_forward.1} parent=1 // loop_footer_branch
      %11 = sbr.rel target = $region3
    $region8: #{networkv3_forward.1} parent=1 // loop_exit
      _
    %1433 = vsyncpa [#allocation3], 1
    %s1434 = scalar_lea.sflag [#allocation3], 1
    %1435 = vsyncpa %s1434, 1

</llo_original>
